<compile_context>
chip_gen: v7x
topology: tpu7x:2x2x1
jax: 0.10.0
libtpu: 0.0.40
codegen_flags: <defaults>
</compile_context>

<pallas_src>
import jax
import jax.numpy as jnp
from jax.experimental import pallas as pl
from jax.experimental.pallas import tpu as pltpu

# Ordering of the 12 linear layers in the PyTorch-convention parameter stack.
U_Z, W_Z, B_Z, U_G, W_G, B_G, U_R, W_R, B_R, U_H, W_H, B_H = range(12)

LANE = 128


def dgm_kernel(x_ref, s_ref, s1_ref, wpre_ref, wh_ref, b_ref, out_ref):
    f32 = jnp.float32
    bf16 = jnp.bfloat16
    D = wh_ref.shape[0]  # lane-padded hidden dim

    s_f32 = s_ref[...].astype(f32)

    # One deep-K (3D) matmul for every pre-activation, gate order Z | G | R | H.
    lhs = jnp.concatenate([x_ref[...], s1_ref[...], s_f32.astype(bf16)], axis=-1)
    pre = jnp.dot(lhs, wpre_ref[...], preferred_element_type=f32) + b_ref[...]

    # R first: the only true dependency chain is R -> S*R -> W_h matmul -> tanh,
    # so the dependent matmul is issued early and the Z/G sigmoids (EUP) overlap
    # the MXU drain.
    R = jax.nn.sigmoid(pre[:, 2 * D:3 * D])
    h_s = jnp.dot((s_f32 * R).astype(bf16), wh_ref[...], preferred_element_type=f32)

    Z = jax.nn.sigmoid(pre[:, :D])
    G = jax.nn.sigmoid(pre[:, D:2 * D])
    H = jnp.tanh(pre[:, 3 * D:] + h_s)

    out_ref[...] = ((1.0 - G) * H + Z * s_f32).astype(out_ref.dtype)


def _vmem_cap_bytes():
    # Physical VMEM differs per generation (v5e/v6e: 128 MiB, v7x: 64 MiB).
    try:
        cap = int(pltpu.get_tpu_info().vmem_capacity_bytes)
    except Exception:
        cap = 64 << 20
    return max(cap - (8 << 20), 32 << 20)


def dgm_layer(x, S, S1, W_pre, Wh, bias):
    """x, S, S1: [B, D] f32.  W_pre: [3*Dp, 4*Dp] bf16 (rows = x|S1|S input blocks,
    cols = Z|G|R|H gate blocks), Wh: [Dp, Dp] bf16, bias: [1, 4*Dp] f32
    (pre-summed per gate).  Dp is D padded up to a multiple of 128."""
    B, D = x.shape
    Dp = Wh.shape[0]

    # Lane-pad activations so gate slices and the output store are (8,128) aligned.
    if Dp != D:
        pad = ((0, 0), (0, Dp - D))
        x, S, S1 = jnp.pad(x, pad), jnp.pad(S, pad), jnp.pad(S1, pad)

    # bf16 activations for the matmul LHS (half the HBM->VMEM DMA); S stays f32
    # for the S*R product and the final combine.
    x_bf = x.astype(jnp.bfloat16)
    s1_bf = S1.astype(jnp.bfloat16)
    s_f32 = S.astype(jnp.float32)

    # Batch tile: whole batch if it fits a single step, else 512-row tiles.
    TB = B if B <= 512 else 512
    grid = (pl.cdiv(B, TB),)
    # Megacore sharding only pays when there is more than one grid step.
    semantics = ("parallel",) if grid[0] > 1 else ("arbitrary",)

    # VMEM budget: 1x resident weights (Buffered(1)) + double-buffered activation
    # tiles + in-kernel intermediates (lhs bf16, pre f32, gate temps), with margin.
    w_item = jnp.dtype(W_pre.dtype).itemsize
    weight_bytes = (W_pre.size + Wh.size) * w_item + bias.size * 4
    act_tile_bytes = TB * Dp * (2 + 2 + 4 + 4)          # x bf16 + S1 bf16 + S f32 + out f32
    interm_bytes = TB * Dp * (3 * 2 + 4 * 4 + 8 * 4)    # lhs + pre + gate/f32 temporaries
    needed = weight_bytes + 2 * act_tile_bytes + interm_bytes + (2 << 20)
    vmem_limit = int(min(max(needed, 32 << 20), _vmem_cap_bytes()))

    # TODO(synk): for D >= ~1280 on v7x the resident bf16 weight slab exceeds
    # ~40 MiB; add a second "arbitrary" grid axis over the fused 4D weight
    # columns (per-gate tiles) and accumulate pre-activations in VMEM scratch.

    act_spec = pl.BlockSpec((TB, Dp), lambda i: (i, 0))
    single = pl.Buffered(1)  # constant index_map -> never re-fetched; no double buffer.

    out = pl.pallas_call(
        dgm_kernel,
        out_shape=jax.ShapeDtypeStruct((B, Dp), x.dtype),
        grid_spec=pltpu.PrefetchScalarGridSpec(
            num_scalar_prefetch=0,
            grid=grid,
            in_specs=[
                act_spec,                                                         # x (bf16)
                act_spec,                                                         # S (f32)
                act_spec,                                                         # S1 (bf16)
                pl.BlockSpec((3 * Dp, 4 * Dp), lambda i: (0, 0), pipeline_mode=single),  # W_pre
                pl.BlockSpec((Dp, Dp), lambda i: (0, 0), pipeline_mode=single),          # W_h
                pl.BlockSpec((1, 4 * Dp), lambda i: (0, 0), pipeline_mode=single),       # bias
            ],
            out_specs=pl.BlockSpec((TB, Dp), lambda i: (i, 0)),
        ),
        compiler_params=pltpu.CompilerParams(
            dimension_semantics=semantics,
            vmem_limit_bytes=vmem_limit,
        ),
    )(x_bf, s_f32, s1_bf, W_pre, Wh, bias)

    return out[:, :D] if Dp != D else out


def pack_params(w_pt, b_pt, weight_dtype=jnp.bfloat16, lane=LANE):
    """Fuse PyTorch-convention params into the kernel layout.

    w_pt: [12, D, D] with PyTorch (out, in) convention; b_pt: [12, D].
    Returns:
      W_pre [3*Dp, 4*Dp]: deep-K fused weights, rows = x | S1 | S input blocks,
                          cols = Z | G | R | H gate blocks ((in, out) layout so
                          the kernel computes v @ W); the S rows of the H block
                          are zero (S does not feed H's pre-activation).
      Wh    [Dp, Dp]    : W_h in (in, out) layout.
      bias  [1, 4*Dp]   : per-gate summed bias row (f32).
    Dp = D rounded up to a multiple of `lane`; padded rows/cols are zero.
    """
    D = w_pt.shape[-1]
    Dp = max(lane, -(-D // lane) * lane)

    wt = jnp.swapaxes(w_pt, 1, 2)                                # (in, out)
    wt = jnp.pad(wt, ((0, 0), (0, Dp - D), (0, Dp - D)))         # each layer -> [Dp, Dp]
    zero = jnp.zeros((Dp, Dp), wt.dtype)

    row_x = jnp.concatenate([wt[U_Z], wt[U_G], wt[U_R], wt[U_H]], axis=1)   # x  -> Z,G,R,H
    row_s1 = jnp.concatenate([wt[B_Z], wt[W_G], wt[B_R], wt[B_H]], axis=1)  # S1 -> Z,G,R,H
    row_s = jnp.concatenate([wt[W_Z], wt[B_G], wt[W_R], zero], axis=1)      # S  -> Z,G,R
    W_pre = jnp.concatenate([row_x, row_s1, row_s], axis=0)                 # [3Dp, 4Dp]
    Wh = wt[W_H]

    b = jnp.pad(b_pt, ((0, 0), (0, Dp - D)))
    bias = jnp.concatenate([
        b[U_Z] + b[W_Z] + b[B_Z],
        b[U_G] + b[W_G] + b[B_G],
        b[U_R] + b[W_R] + b[B_R],
        b[U_H] + b[W_H] + b[B_H],
    ])[None, :].astype(jnp.float32)                                          # [1, 4Dp]

    return W_pre.astype(weight_dtype), Wh.astype(weight_dtype), bias


def dgm_reference(x, S, S1, w_pt, b_pt):
    """Pure-JAX f32 reference with the original (unfused) PyTorch parameters."""
    def lin(i, v):
        return v @ w_pt[i].T + b_pt[i]
    Z = jax.nn.sigmoid(lin(U_Z, x) + lin(W_Z, S) + lin(B_Z, S1))
    G = jax.nn.sigmoid(lin(U_G, x) + lin(W_G, S1) + lin(B_G, S))
    R = jax.nn.sigmoid(lin(U_R, x) + lin(W_R, S) + lin(B_R, S1))
    H = jnp.tanh(lin(U_H, x) + lin(W_H, S * R) + lin(B_H, S1))
    return (1.0 - G) * H + Z * S


if __name__ == "__main__":
    batch, hidden = 8, 32

    key = jax.random.PRNGKey(0)
    k_w, k_b, k_x, k_s, k_s1 = jax.random.split(key, 5)

    # PyTorch-convention params: xavier-normal weights (out, in). Biases are zero
    # in the module's init, but we use small random biases here so the fused-bias
    # wiring is actually exercised (forward semantics are parameter-agnostic).
    std = (2.0 / (hidden + hidden)) ** 0.5
    w_pt = std * jax.random.normal(k_w, (12, hidden, hidden), jnp.float32)
    b_pt = 0.1 * jax.random.normal(k_b, (12, hidden), jnp.float32)

    W_pre, Wh, bias = pack_params(w_pt, b_pt)

    x = jax.random.normal(k_x, (batch, hidden), jnp.float32)
    S = jax.random.normal(k_s, (batch, hidden), jnp.float32)
    S1 = jax.random.normal(k_s1, (batch, hidden), jnp.float32)

    out = jax.block_until_ready(dgm_layer(x, S, S1, W_pre, Wh, bias))

    ref = dgm_reference(x, S, S1, w_pt, b_pt)
    assert out.shape == (batch, hidden)
    # bf16 weights / matmul-LHS activations (f32 accumulation) -> loosened tolerance.
    max_err = float(jnp.max(jnp.abs(out - ref)))
    assert max_err < 3e-2, f"max abs err {max_err}"

    print("KERNEL_OK")
</pallas_src>

<mosaic_0001>
module attributes {stable_mosaic.version = 11 : i64} {
  func.func @dgm_kernel(%arg0: i32, %arg1: memref<8x128xbf16, #tpu.memory_space<vmem>>, %arg2: memref<8x128xf32, #tpu.memory_space<vmem>>, %arg3: memref<8x128xbf16, #tpu.memory_space<vmem>>, %arg4: memref<384x512xbf16, #tpu.memory_space<vmem>>, %arg5: memref<128x128xbf16, #tpu.memory_space<vmem>>, %arg6: memref<1x512xf32, #tpu.memory_space<vmem>>, %arg7: memref<8x128xf32, #tpu.memory_space<vmem>>) attributes {dimension_semantics = [#tpu.dimension_semantics<arbitrary>], iteration_bounds = array<i64: 1>, scalar_prefetch = 0 : i64, scratch_operands = 0 : i64, tpu.core_type = #tpu.core_type<tc>, window_params = [{transform_indices = @transform_0, window_bounds = array<i64: 8, 128>}, {transform_indices = @transform_1, window_bounds = array<i64: 8, 128>}, {transform_indices = @transform_2, window_bounds = array<i64: 8, 128>}, {pipeline_mode = #tpu.pipeline_mode<synchronous>, transform_indices = @transform_3, window_bounds = array<i64: 384, 512>}, {pipeline_mode = #tpu.pipeline_mode<synchronous>, transform_indices = @transform_4, window_bounds = array<i64: 128, 128>}, {pipeline_mode = #tpu.pipeline_mode<synchronous>, transform_indices = @transform_5, window_bounds = array<i64: 1, 512>}, {transform_indices = @transform_6, window_bounds = array<i64: 8, 128>}]} {
    %c0 = arith.constant 0 : index
    %c0_0 = arith.constant 0 : index
    %0 = vector.load %arg2[%c0, %c0_0] : memref<8x128xf32, #tpu.memory_space<vmem>>, vector<8x128xf32>
    %c0_1 = arith.constant 0 : index
    %c0_2 = arith.constant 0 : index
    %1 = vector.load %arg1[%c0_1, %c0_2] : memref<8x128xbf16, #tpu.memory_space<vmem>>, vector<8x128xbf16>
    %c0_3 = arith.constant 0 : index
    %c0_4 = arith.constant 0 : index
    %2 = vector.load %arg3[%c0_3, %c0_4] : memref<8x128xbf16, #tpu.memory_space<vmem>>, vector<8x128xbf16>
    %3 = arith.truncf %0 : vector<8x128xf32> to vector<8x128xbf16>
    %4 = tpu.concatenate %1, %2, %3 in 1 : vector<8x128xbf16>, vector<8x128xbf16>, vector<8x128xbf16> -> vector<8x384xbf16>
    %c0_5 = arith.constant 0 : index
    %c0_6 = arith.constant 0 : index
    %5 = vector.load %arg4[%c0_5, %c0_6] : memref<384x512xbf16, #tpu.memory_space<vmem>>, vector<384x512xbf16>
    %cst = arith.constant dense<0.000000e+00> : vector<8x512xf32>
    %6 = tpu.matmul %4, %5, %cst {dimension_numbers = #tpu.dot_dimension_numbers<[1], [0], [0], [1], [0, 0, 1, 1], [], []>} : vector<8x384xbf16>, vector<384x512xbf16>, vector<8x512xf32> -> vector<8x512xf32>
    %c0_7 = arith.constant 0 : index
    %c0_8 = arith.constant 0 : index
    %7 = vector.load %arg6[%c0_7, %c0_8] : memref<1x512xf32, #tpu.memory_space<vmem>>, vector<1x512xf32>
    %8 = vector.broadcast %7 : vector<1x512xf32> to vector<8x512xf32>
    %9 = arith.addf %6, %8 : vector<8x512xf32>
    %10 = vector.extract_strided_slice %9 {offsets = [0, 256], sizes = [8, 128], strides = [1, 1]} : vector<8x512xf32> to vector<8x128xf32>
    %11 = arith.negf %10 : vector<8x128xf32>
    %12 = math.exp %11 : vector<8x128xf32>
    %cst_9 = arith.constant 1.000000e+00 : f32
    %13 = vector.broadcast %cst_9 : f32 to vector<8x128xf32>
    %14 = arith.addf %13, %12 : vector<8x128xf32>
    %15 = arith.divf %13, %14 : vector<8x128xf32>
    %16 = arith.mulf %0, %15 : vector<8x128xf32>
    %17 = arith.truncf %16 : vector<8x128xf32> to vector<8x128xbf16>
    %c0_10 = arith.constant 0 : index
    %c0_11 = arith.constant 0 : index
    %18 = vector.load %arg5[%c0_10, %c0_11] : memref<128x128xbf16, #tpu.memory_space<vmem>>, vector<128x128xbf16>
    %cst_12 = arith.constant dense<0.000000e+00> : vector<8x128xf32>
    %19 = tpu.matmul %17, %18, %cst_12 {dimension_numbers = #tpu.dot_dimension_numbers<[1], [0], [0], [1], [0, 0, 1, 1], [], []>} : vector<8x128xbf16>, vector<128x128xbf16>, vector<8x128xf32> -> vector<8x128xf32>
    %20 = vector.extract_strided_slice %9 {offsets = [0, 0], sizes = [8, 128], strides = [1, 1]} : vector<8x512xf32> to vector<8x128xf32>
    %21 = arith.negf %20 : vector<8x128xf32>
    %22 = math.exp %21 : vector<8x128xf32>
    %cst_13 = arith.constant 1.000000e+00 : f32
    %23 = vector.broadcast %cst_13 : f32 to vector<8x128xf32>
    %24 = arith.addf %23, %22 : vector<8x128xf32>
    %25 = arith.divf %23, %24 : vector<8x128xf32>
    %26 = vector.extract_strided_slice %9 {offsets = [0, 128], sizes = [8, 128], strides = [1, 1]} : vector<8x512xf32> to vector<8x128xf32>
    %27 = arith.negf %26 : vector<8x128xf32>
    %28 = math.exp %27 : vector<8x128xf32>
    %cst_14 = arith.constant 1.000000e+00 : f32
    %29 = vector.broadcast %cst_14 : f32 to vector<8x128xf32>
    %30 = arith.addf %29, %28 : vector<8x128xf32>
    %31 = arith.divf %29, %30 : vector<8x128xf32>
    %32 = vector.extract_strided_slice %9 {offsets = [0, 384], sizes = [8, 128], strides = [1, 1]} : vector<8x512xf32> to vector<8x128xf32>
    %33 = arith.addf %32, %19 : vector<8x128xf32>
    %34 = math.tanh %33 : vector<8x128xf32>
    %cst_15 = arith.constant 1.000000e+00 : f32
    %35 = vector.broadcast %cst_15 : f32 to vector<8x128xf32>
    %36 = arith.subf %35, %31 : vector<8x128xf32>
    %37 = arith.mulf %36, %34 : vector<8x128xf32>
    %38 = arith.mulf %25, %0 : vector<8x128xf32>
    %39 = arith.addf %37, %38 : vector<8x128xf32>
    %c0_16 = arith.constant 0 : index
    %c0_17 = arith.constant 0 : index
    %40 = vector.load %arg7[%c0_16, %c0_17] : memref<8x128xf32, #tpu.memory_space<vmem>>, vector<8x128xf32>
    tpu.vector_store %arg7[%c0_16, %c0_17], %39 {strides = array<i32>} : memref<8x128xf32, #tpu.memory_space<vmem>>, vector<8x128xf32>,
    return
  }
  func.func @transform_0(%arg0: i32) -> (i32, i32) {
    %c0_i32 = arith.constant 0 : i32
    %c0_i32_0 = arith.constant 0 : i32
    return %arg0, %c0_i32 : i32, i32
  }
  func.func @transform_1(%arg0: i32) -> (i32, i32) {
    %c0_i32 = arith.constant 0 : i32
    %c0_i32_0 = arith.constant 0 : i32
    return %arg0, %c0_i32 : i32, i32
  }
  func.func @transform_2(%arg0: i32) -> (i32, i32) {
    %c0_i32 = arith.constant 0 : i32
    %c0_i32_0 = arith.constant 0 : i32
    return %arg0, %c0_i32 : i32, i32
  }
  func.func @transform_3(%arg0: i32) -> (i32, i32) {
    %c0_i32 = arith.constant 0 : i32
    %c0_i32_0 = arith.constant 0 : i32
    %c0_i32_1 = arith.constant 0 : i32
    return %c0_i32, %c0_i32_0 : i32, i32
  }
  func.func @transform_4(%arg0: i32) -> (i32, i32) {
    %c0_i32 = arith.constant 0 : i32
    %c0_i32_0 = arith.constant 0 : i32
    %c0_i32_1 = arith.constant 0 : i32
    return %c0_i32, %c0_i32_0 : i32, i32
  }
  func.func @transform_5(%arg0: i32) -> (i32, i32) {
    %c0_i32 = arith.constant 0 : i32
    %c0_i32_0 = arith.constant 0 : i32
    %c0_i32_1 = arith.constant 0 : i32
    return %c0_i32, %c0_i32_0 : i32, i32
  }
  func.func @transform_6(%arg0: i32) -> (i32, i32) {
    %c0_i32 = arith.constant 0 : i32
    %c0_i32_0 = arith.constant 0 : i32
    return %arg0, %c0_i32 : i32, i32
  }
}

</mosaic_0001>

<llo_original>
// kernel: tpu_custom_call.1
$region0: #{tpu_custom_call.1}
  #allocation0 [shape = 'u32[]', space=smem, size = 0x4, offset = 0x4, fixed_abs, tag = 'smem constant byte address 0x4 - core index']
  #allocation1 [shape = 'u32[144,128]{1,0:T(1,128)}', space=vmem, size = 0x12000, scoped, tag = 'internal scratch']
  %s0 = inlined_call_operand.hbm [shape: bf16[8,128], index: 0, kind: input, shape index: {}]
  %s1 = inlined_call_operand.hbm [shape: f32[8,128], index: 1, kind: input, shape index: {}]
  %s2 = inlined_call_operand.vmem [shape: bf16[8,128], index: 2, kind: input, shape index: {}]
  %s3 = inlined_call_operand.hbm [shape: bf16[384,512], index: 3, kind: input, shape index: {}]
  %s4 = inlined_call_operand.hbm [shape: bf16[128,128], index: 4, kind: input, shape index: {}]
  %s5 = inlined_call_operand.vmem [shape: f32[1,512], index: 5, kind: input, shape index: {}]
  %s6 = inlined_call_operand.hbm [shape: f32[8,128], index: 6, kind: output, shape index: {}]
  %s7 = sld [smem:[#allocation0]]
  $region50: #{tpu_custom_call.1} parent=0
    _
  %s9 = ssub.s32 1, %s7
  %s10 = scalar_select 0, %s9, %s7
  $region1: #{tpu_custom_call.1} parent=0
    #allocation2 [shape = 'u8[2048]{0}', space=vmem, size = 0x800, scoped, tag = 'input window, operand 0, single buffered']
    #allocation3 [shape = 's32[1]{0}', space=sflag, size = 0x4, scoped, tag = 'scoped memory for tpu_custom_call.1']
    #allocation4 [shape = 's32[1]{0}', space=sflag, size = 0x4, scoped, tag = 'scoped memory for tpu_custom_call.1']
    #allocation5 [shape = 'u8[4096]{0}', space=vmem, size = 0x1000, scoped, tag = 'input window, operand 1, single buffered']
    #allocation6 [shape = 's32[1]{0}', space=sflag, size = 0x4, scoped, tag = 'scoped memory for tpu_custom_call.1']
    #allocation7 [shape = 'u8[393216]{0}', space=vmem, size = 0x60000, scoped, tag = 'input window, operand 3, single buffered']
    #allocation8 [shape = 'u8[32768]{0}', space=vmem, size = 0x8000, scoped, tag = 'input window, operand 4, single buffered']
    #allocation9 [shape = 's32[1]{0}', space=sflag, size = 0x4, scoped, tag = 'scoped memory for tpu_custom_call.1']
    #allocation10 [shape = 'u8[4096]{0}', space=vmem, size = 0x1000, scoped, tag = 'output window, operand 0, single buffered']
    %11 = vsyncpa [#allocation3], 0
    %12 = vsyncpa [#allocation6], 0
    %13 = vsyncpa [#allocation9], 0
    %14 = vsyncpa [#allocation4], 0
    // Predicated region
    $region2: #{tpu_custom_call.1} parent=1 // pred_check
      _
    $region3: #{tpu_custom_call.1} parent=1 // pred_check_branch
      %16 = sbr.rel (0) target = $region5
    $region4: #{tpu_custom_call.1} parent=1 // pred_region
      %s18 = ssub.s32 64, 64
      %19 = vsyncadd [#allocation3], %s18
      %s21 = sshll.u32 [#allocation2], 4
      %s22 = int_to_ptr.vmem [resolvable:$true] %s21
      %24 = dma.hbm_to_vmem [thread:$0]  %s0, 64, %s22, [#allocation3]
    $region5: #{tpu_custom_call.1} parent=1 // pred_fallthru
      _
    // Predicated region
    $region6: #{tpu_custom_call.1} parent=1 // pred_check
      _
    $region7: #{tpu_custom_call.1} parent=1 // pred_check_branch
      %26 = sbr.rel (0) target = $region9
    $region8: #{tpu_custom_call.1} parent=1 // pred_region
      %s28 = ssub.s32 128, 128
      %29 = vsyncadd [#allocation6], %s28
      %s31 = sshll.u32 [#allocation5], 4
      %s32 = int_to_ptr.vmem [resolvable:$true] %s31
      %34 = dma.hbm_to_vmem [thread:$0]  %s1, 128, %s32, [#allocation6]
    $region9: #{tpu_custom_call.1} parent=1 // pred_fallthru
      _
    // Predicated region
    $region10: #{tpu_custom_call.1} parent=1 // pred_check
      _
    $region11: #{tpu_custom_call.1} parent=1 // pred_check_branch
      %36 = sbr.rel (0) target = $region13
    $region12: #{tpu_custom_call.1} parent=1 // pred_region
      _
    $region13: #{tpu_custom_call.1} parent=1 // pred_fallthru
      _
    // Predicated region
    $region14: #{tpu_custom_call.1} parent=1 // pred_check
      _
    $region15: #{tpu_custom_call.1} parent=1 // pred_check_branch
      %38 = sbr.rel (0) target = $region17
    $region16: #{tpu_custom_call.1} parent=1 // pred_region
      %s40 = ssub.s32 12288, 12288
      %41 = vsyncadd [#allocation6], %s40
      %s42 = sshll.u32 [#allocation7], 4
      %s43 = int_to_ptr.vmem [resolvable:$true] %s42
      %48 = dma.hbm_to_vmem [thread:$0]  %s3, 12288, %s43, [#allocation6], 256, 256, 16
    $region17: #{tpu_custom_call.1} parent=1 // pred_fallthru
      _
    // Predicated region
    $region18: #{tpu_custom_call.1} parent=1 // pred_check
      _
    $region19: #{tpu_custom_call.1} parent=1 // pred_check_branch
      %50 = sbr.rel (0) target = $region21
    $region20: #{tpu_custom_call.1} parent=1 // pred_region
      %s52 = ssub.s32 1024, 1024
      %53 = vsyncadd [#allocation9], %s52
      %s54 = sshll.u32 [#allocation8], 4
      %s55 = int_to_ptr.vmem [resolvable:$true] %s54
      %60 = dma.hbm_to_vmem [thread:$0]  %s4, 1024, %s55, [#allocation9], 64, 64, 4
    $region21: #{tpu_custom_call.1} parent=1 // pred_fallthru
      _
    // Predicated region
    $region22: #{tpu_custom_call.1} parent=1 // pred_check
      _
    $region23: #{tpu_custom_call.1} parent=1 // pred_check_branch
      %62 = sbr.rel (0) target = $region25
    $region24: #{tpu_custom_call.1} parent=1 // pred_region
      _
    $region25: #{tpu_custom_call.1} parent=1 // pred_fallthru
      _
    // Predicated region
    $region26: #{tpu_custom_call.1} parent=1 // pred_check
      _
    $region27: #{tpu_custom_call.1} parent=1 // pred_check_branch
      %64 = sbr.rel (0) target = $region29
    $region28: #{tpu_custom_call.1} parent=1 // pred_region
      %65 = dma.done [#allocation3], 64
    $region29: #{tpu_custom_call.1} parent=1 // pred_fallthru
      _
    // Predicated region
    $region30: #{tpu_custom_call.1} parent=1 // pred_check
      _
    $region31: #{tpu_custom_call.1} parent=1 // pred_check_branch
      %67 = sbr.rel (0) target = $region33
    $region32: #{tpu_custom_call.1} parent=1 // pred_region
      %68 = dma.done [#allocation6], 128
    $region33: #{tpu_custom_call.1} parent=1 // pred_fallthru
      _
    // Predicated region
    $region34: #{tpu_custom_call.1} parent=1 // pred_check
      _
    $region35: #{tpu_custom_call.1} parent=1 // pred_check_branch
      %70 = sbr.rel (0) target = $region37
    $region36: #{tpu_custom_call.1} parent=1 // pred_region
      %71 = dma.done [#allocation6], 12288
    $region37: #{tpu_custom_call.1} parent=1 // pred_fallthru
      _
    // Predicated region
    $region38: #{tpu_custom_call.1} parent=1 // pred_check
      _
    $region39: #{tpu_custom_call.1} parent=1 // pred_check_branch
      %73 = sbr.rel (0) target = $region41
    $region40: #{tpu_custom_call.1} parent=1 // pred_region
      %74 = dma.done [#allocation9], 1024
    $region41: #{tpu_custom_call.1} parent=1 // pred_fallthru
      _
    %v76 = vld [vmem:[#allocation5] sm:$0xff]
    %v77 = vld [vmem:[#allocation2] sm:$0xf]
    %v78 = vld [vmem:[%s2] sm:$0xf]
    %v79 = vpack.c.bf16 %v76, %v76
    %v80 = vld [vmem:[#allocation7] sm:$0xff]
    %v81 = vld [vmem:[#allocation7 + $0x8] sm:$0xff]
    %v82 = vld [vmem:[#allocation7 + $0x10] sm:$0xff]
    %v83 = vld [vmem:[#allocation7 + $0x18] sm:$0xff]
    %v84 = vld [vmem:[#allocation7 + $0x20] sm:$0xff]
    %v85 = vld [vmem:[#allocation7 + $0x28] sm:$0xff]
    %v86 = vld [vmem:[#allocation7 + $0x30] sm:$0xff]
    %v87 = vld [vmem:[#allocation7 + $0x38] sm:$0xff]
    %v88 = vld [vmem:[#allocation7 + $0x40] sm:$0xff]
    %v89 = vld [vmem:[#allocation7 + $0x48] sm:$0xff]
    %v90 = vld [vmem:[#allocation7 + $0x50] sm:$0xff]
    %v91 = vld [vmem:[#allocation7 + $0x58] sm:$0xff]
    %v92 = vld [vmem:[#allocation7 + $0x60] sm:$0xff]
    %v93 = vld [vmem:[#allocation7 + $0x68] sm:$0xff]
    %v94 = vld [vmem:[#allocation7 + $0x70] sm:$0xff]
    %v95 = vld [vmem:[#allocation7 + $0x78] sm:$0xff]
    %v96 = vld [vmem:[#allocation7 + $0x80] sm:$0xff]
    %v97 = vld [vmem:[#allocation7 + $0x88] sm:$0xff]
    %v98 = vld [vmem:[#allocation7 + $0x90] sm:$0xff]
    %v99 = vld [vmem:[#allocation7 + $0x98] sm:$0xff]
    %v100 = vld [vmem:[#allocation7 + $0xa0] sm:$0xff]
    %v101 = vld [vmem:[#allocation7 + $0xa8] sm:$0xff]
    %v102 = vld [vmem:[#allocation7 + $0xb0] sm:$0xff]
    %v103 = vld [vmem:[#allocation7 + $0xb8] sm:$0xff]
    %v104 = vld [vmem:[#allocation7 + $0xc0] sm:$0xff]
    %v105 = vld [vmem:[#allocation7 + $0xc8] sm:$0xff]
    %v106 = vld [vmem:[#allocation7 + $0xd0] sm:$0xff]
    %v107 = vld [vmem:[#allocation7 + $0xd8] sm:$0xff]
    %v108 = vld [vmem:[#allocation7 + $0xe0] sm:$0xff]
    %v109 = vld [vmem:[#allocation7 + $0xe8] sm:$0xff]
    %v110 = vld [vmem:[#allocation7 + $0xf0] sm:$0xff]
    %v111 = vld [vmem:[#allocation7 + $0xf8] sm:$0xff]
    %v112 = vld [vmem:[#allocation7 + $0x100] sm:$0xff]
    %v113 = vld [vmem:[#allocation7 + $0x108] sm:$0xff]
    %v114 = vld [vmem:[#allocation7 + $0x110] sm:$0xff]
    %v115 = vld [vmem:[#allocation7 + $0x118] sm:$0xff]
    %v116 = vld [vmem:[#allocation7 + $0x120] sm:$0xff]
    %v117 = vld [vmem:[#allocation7 + $0x128] sm:$0xff]
    %v118 = vld [vmem:[#allocation7 + $0x130] sm:$0xff]
    %v119 = vld [vmem:[#allocation7 + $0x138] sm:$0xff]
    %v120 = vld [vmem:[#allocation7 + $0x140] sm:$0xff]
    %v121 = vld [vmem:[#allocation7 + $0x148] sm:$0xff]
    %v122 = vld [vmem:[#allocation7 + $0x150] sm:$0xff]
    %v123 = vld [vmem:[#allocation7 + $0x158] sm:$0xff]
    %v124 = vld [vmem:[#allocation7 + $0x160] sm:$0xff]
    %v125 = vld [vmem:[#allocation7 + $0x168] sm:$0xff]
    %v126 = vld [vmem:[#allocation7 + $0x170] sm:$0xff]
    %v127 = vld [vmem:[#allocation7 + $0x178] sm:$0xff]
    %v128 = vld [vmem:[#allocation7 + $0x180] sm:$0xff]
    %v129 = vld [vmem:[#allocation7 + $0x188] sm:$0xff]
    %v130 = vld [vmem:[#allocation7 + $0x190] sm:$0xff]
    %v131 = vld [vmem:[#allocation7 + $0x198] sm:$0xff]
    %v132 = vld [vmem:[#allocation7 + $0x1a0] sm:$0xff]
    %v133 = vld [vmem:[#allocation7 + $0x1a8] sm:$0xff]
    %v134 = vld [vmem:[#allocation7 + $0x1b0] sm:$0xff]
    %v135 = vld [vmem:[#allocation7 + $0x1b8] sm:$0xff]
    %v136 = vld [vmem:[#allocation7 + $0x1c0] sm:$0xff]
    %v137 = vld [vmem:[#allocation7 + $0x1c8] sm:$0xff]
    %v138 = vld [vmem:[#allocation7 + $0x1d0] sm:$0xff]
    %v139 = vld [vmem:[#allocation7 + $0x1d8] sm:$0xff]
    %v140 = vld [vmem:[#allocation7 + $0x1e0] sm:$0xff]
    %v141 = vld [vmem:[#allocation7 + $0x1e8] sm:$0xff]
    %v142 = vld [vmem:[#allocation7 + $0x1f0] sm:$0xff]
    %v143 = vld [vmem:[#allocation7 + $0x1f8] sm:$0xff]
    %v144 = vld [vmem:[#allocation7 + $0x200] sm:$0xff]
    %v145 = vld [vmem:[#allocation7 + $0x208] sm:$0xff]
    %v146 = vld [vmem:[#allocation7 + $0x210] sm:$0xff]
    %v147 = vld [vmem:[#allocation7 + $0x218] sm:$0xff]
    %v148 = vld [vmem:[#allocation7 + $0x220] sm:$0xff]
    %v149 = vld [vmem:[#allocation7 + $0x228] sm:$0xff]
    %v150 = vld [vmem:[#allocation7 + $0x230] sm:$0xff]
    %v151 = vld [vmem:[#allocation7 + $0x238] sm:$0xff]
    %v152 = vld [vmem:[#allocation7 + $0x240] sm:$0xff]
    %v153 = vld [vmem:[#allocation7 + $0x248] sm:$0xff]
    %v154 = vld [vmem:[#allocation7 + $0x250] sm:$0xff]
    %v155 = vld [vmem:[#allocation7 + $0x258] sm:$0xff]
    %v156 = vld [vmem:[#allocation7 + $0x260] sm:$0xff]
    %v157 = vld [vmem:[#allocation7 + $0x268] sm:$0xff]
    %v158 = vld [vmem:[#allocation7 + $0x270] sm:$0xff]
    %v159 = vld [vmem:[#allocation7 + $0x278] sm:$0xff]
    %v160 = vld [vmem:[#allocation7 + $0x280] sm:$0xff]
    %v161 = vld [vmem:[#allocation7 + $0x288] sm:$0xff]
    %v162 = vld [vmem:[#allocation7 + $0x290] sm:$0xff]
    %v163 = vld [vmem:[#allocation7 + $0x298] sm:$0xff]
    %v164 = vld [vmem:[#allocation7 + $0x2a0] sm:$0xff]
    %v165 = vld [vmem:[#allocation7 + $0x2a8] sm:$0xff]
    %v166 = vld [vmem:[#allocation7 + $0x2b0] sm:$0xff]
    %v167 = vld [vmem:[#allocation7 + $0x2b8] sm:$0xff]
    %v168 = vld [vmem:[#allocation7 + $0x2c0] sm:$0xff]
    %v169 = vld [vmem:[#allocation7 + $0x2c8] sm:$0xff]
    %v170 = vld [vmem:[#allocation7 + $0x2d0] sm:$0xff]
    %v171 = vld [vmem:[#allocation7 + $0x2d8] sm:$0xff]
    %v172 = vld [vmem:[#allocation7 + $0x2e0] sm:$0xff]
    %v173 = vld [vmem:[#allocation7 + $0x2e8] sm:$0xff]
    %v174 = vld [vmem:[#allocation7 + $0x2f0] sm:$0xff]
    %v175 = vld [vmem:[#allocation7 + $0x2f8] sm:$0xff]
    %v176 = vld [vmem:[%s5] sm:$0xf]
    %v178 = vlaneseq
    %v179 = vshrl.u32 %v178, 7
    %v180 = vsub.s32 0, %v179
    %v181 = vrot.slane %v176, %v180
    %v182 = vlaneseq
    %v183 = vshrl.u32 %v182, 7
    %v184 = vsub.s32 1, %v183
    %v185 = vrot.slane %v176, %v184
    %v186 = vlaneseq
    %v187 = vshrl.u32 %v186, 7
    %v188 = vsub.s32 2, %v187
    %v189 = vrot.slane %v176, %v188
    %v190 = vlaneseq
    %v191 = vshrl.u32 %v190, 7
    %v192 = vsub.s32 3, %v191
    %v193 = vrot.slane %v176, %v192
    %v294 = vunpack.c.l.b16 %v80
    %v295 = vunpack.c.h.b16 %v80
    %v296 = vunpack.c.l.b16 %v81
    %v297 = vunpack.c.h.b16 %v81
    %v298 = vunpack.c.l.b16 %v82
    %v299 = vunpack.c.h.b16 %v82
    %v300 = vunpack.c.l.b16 %v83
    %v301 = vunpack.c.h.b16 %v83
    %v302 = vunpack.c.l.b16 %v84
    %v303 = vunpack.c.h.b16 %v84
    %v304 = vunpack.c.l.b16 %v85
    %v305 = vunpack.c.h.b16 %v85
    %v306 = vunpack.c.l.b16 %v86
    %v307 = vunpack.c.h.b16 %v86
    %v308 = vunpack.c.l.b16 %v87
    %v309 = vunpack.c.h.b16 %v87
    %v310 = vunpack.c.l.b16 %v88
    %v311 = vunpack.c.h.b16 %v88
    %v312 = vunpack.c.l.b16 %v89
    %v313 = vunpack.c.h.b16 %v89
    %v314 = vunpack.c.l.b16 %v90
    %v315 = vunpack.c.h.b16 %v90
    %v316 = vunpack.c.l.b16 %v91
    %v317 = vunpack.c.h.b16 %v91
    %v318 = vunpack.c.l.b16 %v92
    %v319 = vunpack.c.h.b16 %v92
    %v320 = vunpack.c.l.b16 %v93
    %v321 = vunpack.c.h.b16 %v93
    %v322 = vunpack.c.l.b16 %v94
    %v323 = vunpack.c.h.b16 %v94
    %v324 = vunpack.c.l.b16 %v95
    %v325 = vunpack.c.h.b16 %v95
    %v326 = vunpack.c.l.b16 %v96
    %v327 = vunpack.c.h.b16 %v96
    %v328 = vunpack.c.l.b16 %v97
    %v329 = vunpack.c.h.b16 %v97
    %v330 = vunpack.c.l.b16 %v98
    %v331 = vunpack.c.h.b16 %v98
    %v332 = vunpack.c.l.b16 %v99
    %v333 = vunpack.c.h.b16 %v99
    %v334 = vunpack.c.l.b16 %v100
    %v335 = vunpack.c.h.b16 %v100
    %v336 = vunpack.c.l.b16 %v101
    %v337 = vunpack.c.h.b16 %v101
    %v338 = vunpack.c.l.b16 %v102
    %v339 = vunpack.c.h.b16 %v102
    %v340 = vunpack.c.l.b16 %v103
    %v341 = vunpack.c.h.b16 %v103
    %v342 = vunpack.c.l.b16 %v104
    %v343 = vunpack.c.h.b16 %v104
    %v344 = vunpack.c.l.b16 %v105
    %v345 = vunpack.c.h.b16 %v105
    %v346 = vunpack.c.l.b16 %v106
    %v347 = vunpack.c.h.b16 %v106
    %v348 = vunpack.c.l.b16 %v107
    %v349 = vunpack.c.h.b16 %v107
    %v350 = vunpack.c.l.b16 %v108
    %v351 = vunpack.c.h.b16 %v108
    %v352 = vunpack.c.l.b16 %v109
    %v353 = vunpack.c.h.b16 %v109
    %v354 = vunpack.c.l.b16 %v110
    %v355 = vunpack.c.h.b16 %v110
    %v356 = vunpack.c.l.b16 %v111
    %v357 = vunpack.c.h.b16 %v111
    %v358 = vunpack.c.l.b16 %v112
    %v359 = vunpack.c.h.b16 %v112
    %v360 = vunpack.c.l.b16 %v113
    %v361 = vunpack.c.h.b16 %v113
    %v362 = vunpack.c.l.b16 %v114
    %v363 = vunpack.c.h.b16 %v114
    %v364 = vunpack.c.l.b16 %v115
    %v365 = vunpack.c.h.b16 %v115
    %v366 = vunpack.c.l.b16 %v116
    %v367 = vunpack.c.h.b16 %v116
    %v368 = vunpack.c.l.b16 %v117
    %v369 = vunpack.c.h.b16 %v117
    %v370 = vunpack.c.l.b16 %v118
    %v371 = vunpack.c.h.b16 %v118
    %v372 = vunpack.c.l.b16 %v119
    %v373 = vunpack.c.h.b16 %v119
    %v374 = vunpack.c.l.b16 %v120
    %v375 = vunpack.c.h.b16 %v120
    %v376 = vunpack.c.l.b16 %v121
    %v377 = vunpack.c.h.b16 %v121
    %v378 = vunpack.c.l.b16 %v122
    %v379 = vunpack.c.h.b16 %v122
    %v380 = vunpack.c.l.b16 %v123
    %v381 = vunpack.c.h.b16 %v123
    %v382 = vunpack.c.l.b16 %v124
    %v383 = vunpack.c.h.b16 %v124
    %v384 = vunpack.c.l.b16 %v125
    %v385 = vunpack.c.h.b16 %v125
    %v386 = vunpack.c.l.b16 %v126
    %v387 = vunpack.c.h.b16 %v126
    %v388 = vunpack.c.l.b16 %v127
    %v389 = vunpack.c.h.b16 %v127
    %v390 = vunpack.c.l.b16 %v128
    %v391 = vunpack.c.h.b16 %v128
    %v392 = vunpack.c.l.b16 %v129
    %v393 = vunpack.c.h.b16 %v129
    %v394 = vunpack.c.l.b16 %v130
    %v395 = vunpack.c.h.b16 %v130
    %v396 = vunpack.c.l.b16 %v131
    %v397 = vunpack.c.h.b16 %v131
    %v398 = vunpack.c.l.b16 %v132
    %v399 = vunpack.c.h.b16 %v132
    %v400 = vunpack.c.l.b16 %v133
    %v401 = vunpack.c.h.b16 %v133
    %v402 = vunpack.c.l.b16 %v134
    %v403 = vunpack.c.h.b16 %v134
    %v404 = vunpack.c.l.b16 %v135
    %v405 = vunpack.c.h.b16 %v135
    %v406 = vunpack.c.l.b16 %v136
    %v407 = vunpack.c.h.b16 %v136
    %v408 = vunpack.c.l.b16 %v137
    %v409 = vunpack.c.h.b16 %v137
    %v410 = vunpack.c.l.b16 %v138
    %v411 = vunpack.c.h.b16 %v138
    %v412 = vunpack.c.l.b16 %v139
    %v413 = vunpack.c.h.b16 %v139
    %v414 = vunpack.c.l.b16 %v140
    %v415 = vunpack.c.h.b16 %v140
    %v416 = vunpack.c.l.b16 %v141
    %v417 = vunpack.c.h.b16 %v141
    %v418 = vunpack.c.l.b16 %v142
    %v419 = vunpack.c.h.b16 %v142
    %v420 = vunpack.c.l.b16 %v143
    %v421 = vunpack.c.h.b16 %v143
    %v422 = vunpack.c.l.b16 %v144
    %v423 = vunpack.c.h.b16 %v144
    %v424 = vunpack.c.l.b16 %v145
    %v425 = vunpack.c.h.b16 %v145
    %v426 = vunpack.c.l.b16 %v146
    %v427 = vunpack.c.h.b16 %v146
    %v428 = vunpack.c.l.b16 %v147
    %v429 = vunpack.c.h.b16 %v147
    %v430 = vunpack.c.l.b16 %v148
    %v431 = vunpack.c.h.b16 %v148
    %v432 = vunpack.c.l.b16 %v149
    %v433 = vunpack.c.h.b16 %v149
    %v434 = vunpack.c.l.b16 %v150
    %v435 = vunpack.c.h.b16 %v150
    %v436 = vunpack.c.l.b16 %v151
    %v437 = vunpack.c.h.b16 %v151
    %v438 = vunpack.c.l.b16 %v152
    %v439 = vunpack.c.h.b16 %v152
    %v440 = vunpack.c.l.b16 %v153
    %v441 = vunpack.c.h.b16 %v153
    %v442 = vunpack.c.l.b16 %v154
    %v443 = vunpack.c.h.b16 %v154
    %v444 = vunpack.c.l.b16 %v155
    %v445 = vunpack.c.h.b16 %v155
    %v446 = vunpack.c.l.b16 %v156
    %v447 = vunpack.c.h.b16 %v156
    %v448 = vunpack.c.l.b16 %v157
    %v449 = vunpack.c.h.b16 %v157
    %v450 = vunpack.c.l.b16 %v158
    %v451 = vunpack.c.h.b16 %v158
    %v452 = vunpack.c.l.b16 %v159
    %v453 = vunpack.c.h.b16 %v159
    %v454 = vunpack.c.l.b16 %v160
    %v455 = vunpack.c.h.b16 %v160
    %v456 = vunpack.c.l.b16 %v161
    %v457 = vunpack.c.h.b16 %v161
    %v458 = vunpack.c.l.b16 %v162
    %v459 = vunpack.c.h.b16 %v162
    %v460 = vunpack.c.l.b16 %v163
    %v461 = vunpack.c.h.b16 %v163
    %v462 = vunpack.c.l.b16 %v164
    %v463 = vunpack.c.h.b16 %v164
    %v464 = vunpack.c.l.b16 %v165
    %v465 = vunpack.c.h.b16 %v165
    %v466 = vunpack.c.l.b16 %v166
    %v467 = vunpack.c.h.b16 %v166
    %v468 = vunpack.c.l.b16 %v167
    %v469 = vunpack.c.h.b16 %v167
    %v470 = vunpack.c.l.b16 %v168
    %v471 = vunpack.c.h.b16 %v168
    %v472 = vunpack.c.l.b16 %v169
    %v473 = vunpack.c.h.b16 %v169
    %v474 = vunpack.c.l.b16 %v170
    %v475 = vunpack.c.h.b16 %v170
    %v476 = vunpack.c.l.b16 %v171
    %v477 = vunpack.c.h.b16 %v171
    %v478 = vunpack.c.l.b16 %v172
    %v479 = vunpack.c.h.b16 %v172
    %v480 = vunpack.c.l.b16 %v173
    %v481 = vunpack.c.h.b16 %v173
    %v482 = vunpack.c.l.b16 %v174
    %v483 = vunpack.c.h.b16 %v174
    %v484 = vunpack.c.l.b16 %v175
    %v485 = vunpack.c.h.b16 %v175
    %v486 = vpack.c.b16 %v298, %v294
    %v487 = vpack.c.b16 %v299, %v295
    %v488 = vpack.c.b16 %v300, %v296
    %v489 = vpack.c.b16 %v301, %v297
    %v490 = vpack.c.b16 %v306, %v302
    %v491 = vpack.c.b16 %v307, %v303
    %v492 = vpack.c.b16 %v308, %v304
    %v493 = vpack.c.b16 %v309, %v305
    %v494 = vpack.c.b16 %v314, %v310
    %v495 = vpack.c.b16 %v315, %v311
    %v496 = vpack.c.b16 %v316, %v312
    %v497 = vpack.c.b16 %v317, %v313
    %v498 = vpack.c.b16 %v322, %v318
    %v499 = vpack.c.b16 %v323, %v319
    %v500 = vpack.c.b16 %v324, %v320
    %v501 = vpack.c.b16 %v325, %v321
    %v502 = vpack.c.b16 %v330, %v326
    %v503 = vpack.c.b16 %v331, %v327
    %v504 = vpack.c.b16 %v332, %v328
    %v505 = vpack.c.b16 %v333, %v329
    %v506 = vpack.c.b16 %v338, %v334
    %v507 = vpack.c.b16 %v339, %v335
    %v508 = vpack.c.b16 %v340, %v336
    %v509 = vpack.c.b16 %v341, %v337
    %v510 = vpack.c.b16 %v346, %v342
    %v511 = vpack.c.b16 %v347, %v343
    %v512 = vpack.c.b16 %v348, %v344
    %v513 = vpack.c.b16 %v349, %v345
    %v514 = vpack.c.b16 %v354, %v350
    %v515 = vpack.c.b16 %v355, %v351
    %v516 = vpack.c.b16 %v356, %v352
    %v517 = vpack.c.b16 %v357, %v353
    %v518 = vpack.c.b16 %v362, %v358
    %v519 = vpack.c.b16 %v363, %v359
    %v520 = vpack.c.b16 %v364, %v360
    %v521 = vpack.c.b16 %v365, %v361
    %v522 = vpack.c.b16 %v370, %v366
    %v523 = vpack.c.b16 %v371, %v367
    %v524 = vpack.c.b16 %v372, %v368
    %v525 = vpack.c.b16 %v373, %v369
    %v526 = vpack.c.b16 %v378, %v374
    %v527 = vpack.c.b16 %v379, %v375
    %v528 = vpack.c.b16 %v380, %v376
    %v529 = vpack.c.b16 %v381, %v377
    %v530 = vpack.c.b16 %v386, %v382
    %v531 = vpack.c.b16 %v387, %v383
    %v532 = vpack.c.b16 %v388, %v384
    %v533 = vpack.c.b16 %v389, %v385
    %v534 = vpack.c.b16 %v394, %v390
    %v535 = vpack.c.b16 %v395, %v391
    %v536 = vpack.c.b16 %v396, %v392
    %v537 = vpack.c.b16 %v397, %v393
    %v538 = vpack.c.b16 %v402, %v398
    %v539 = vpack.c.b16 %v403, %v399
    %v540 = vpack.c.b16 %v404, %v400
    %v541 = vpack.c.b16 %v405, %v401
    %v542 = vpack.c.b16 %v410, %v406
    %v543 = vpack.c.b16 %v411, %v407
    %v544 = vpack.c.b16 %v412, %v408
    %v545 = vpack.c.b16 %v413, %v409
    %v546 = vpack.c.b16 %v418, %v414
    %v547 = vpack.c.b16 %v419, %v415
    %v548 = vpack.c.b16 %v420, %v416
    %v549 = vpack.c.b16 %v421, %v417
    %v550 = vpack.c.b16 %v426, %v422
    %v551 = vpack.c.b16 %v427, %v423
    %v552 = vpack.c.b16 %v428, %v424
    %v553 = vpack.c.b16 %v429, %v425
    %v554 = vpack.c.b16 %v434, %v430
    %v555 = vpack.c.b16 %v435, %v431
    %v556 = vpack.c.b16 %v436, %v432
    %v557 = vpack.c.b16 %v437, %v433
    %v558 = vpack.c.b16 %v442, %v438
    %v559 = vpack.c.b16 %v443, %v439
    %v560 = vpack.c.b16 %v444, %v440
    %v561 = vpack.c.b16 %v445, %v441
    %v562 = vpack.c.b16 %v450, %v446
    %v563 = vpack.c.b16 %v451, %v447
    %v564 = vpack.c.b16 %v452, %v448
    %v565 = vpack.c.b16 %v453, %v449
    %v566 = vpack.c.b16 %v458, %v454
    %v567 = vpack.c.b16 %v459, %v455
    %v568 = vpack.c.b16 %v460, %v456
    %v569 = vpack.c.b16 %v461, %v457
    %v570 = vpack.c.b16 %v466, %v462
    %v571 = vpack.c.b16 %v467, %v463
    %v572 = vpack.c.b16 %v468, %v464
    %v573 = vpack.c.b16 %v469, %v465
    %v574 = vpack.c.b16 %v474, %v470
    %v575 = vpack.c.b16 %v475, %v471
    %v576 = vpack.c.b16 %v476, %v472
    %v577 = vpack.c.b16 %v477, %v473
    %v578 = vpack.c.b16 %v482, %v478
    %v579 = vpack.c.b16 %v483, %v479
    %v580 = vpack.c.b16 %v484, %v480
    %v581 = vpack.c.b16 %v485, %v481
    %678 = vmatprep.subr.bf16.mxu0 %v487
    %679 = vmatpush1.bf16.msra.mxu0 %v486
    %680 = vmatprep.subr.bf16.mxu0 %v491
    %681 = vmatpush1.bf16.msra.mxu0 %v490
    %682 = vmatprep.subr.bf16.mxu0 %v495
    %683 = vmatpush1.bf16.msra.mxu0 %v494
    %684 = vmatprep.subr.bf16.mxu0 %v499
    %685 = vmatpush1.bf16.msra.mxu0 %v498
    %686 = vmatprep.subr.bf16.mxu0 %v503
    %687 = vmatpush1.bf16.msra.mxu0 %v502
    %688 = vmatprep.subr.bf16.mxu0 %v507
    %689 = vmatpush1.bf16.msra.mxu0 %v506
    %690 = vmatprep.subr.bf16.mxu0 %v511
    %691 = vmatpush1.bf16.msra.mxu0 %v510
    %692 = vmatprep.subr.bf16.mxu0 %v515
    %693 = vmatpush1.bf16.msra.mxu0 %v514
    %694 = vmatprep.subr.bf16.mxu0 %v519
    %695 = vmatpush1.bf16.msra.mxu0 %v518
    %696 = vmatprep.subr.bf16.mxu0 %v523
    %697 = vmatpush1.bf16.msra.mxu0 %v522
    %698 = vmatprep.subr.bf16.mxu0 %v527
    %699 = vmatpush1.bf16.msra.mxu0 %v526
    %700 = vmatprep.subr.bf16.mxu0 %v531
    %701 = vmatpush1.bf16.msra.mxu0 %v530
    %702 = vmatprep.subr.bf16.mxu0 %v535
    %703 = vmatpush1.bf16.msra.mxu0 %v534
    %704 = vmatprep.subr.bf16.mxu0 %v539
    %705 = vmatpush1.bf16.msra.mxu0 %v538
    %706 = vmatprep.subr.bf16.mxu0 %v543
    %707 = vmatpush1.bf16.msra.mxu0 %v542
    %708 = vmatprep.subr.bf16.mxu0 %v547
    %709 = vmatpush1.bf16.msra.mxu0 %v546
    %710 = vmatprep.mubr.bf16.mxu0 %v78
    %711 = vmatmul.mubr.bf16.gmra.mrb[0].mxu0 %v77
    %v712 = vpop.f32.mrb[0].mxu0
    %v713 = vadd.f32 %v181, %v712
    %v714 = vpop.f32.mrb[0].mxu0
    %v715 = vadd.f32 %v185, %v714
    %v716 = vpop.f32.mrb[0].mxu0
    %v717 = vpop.f32.mrb[0].mxu0
    %718 = vdwg.mxu0
    %719 = vmatprep.subr.bf16.mxu0 %v551
    %720 = vmatpush1.bf16.msra.mxu0 %v550
    %721 = vmatprep.subr.bf16.mxu0 %v555
    %722 = vmatpush1.bf16.msra.mxu0 %v554
    %723 = vmatprep.subr.bf16.mxu0 %v559
    %724 = vmatpush1.bf16.msra.mxu0 %v558
    %725 = vmatprep.subr.bf16.mxu0 %v563
    %726 = vmatpush1.bf16.msra.mxu0 %v562
    %727 = vmatprep.subr.bf16.mxu0 %v567
    %728 = vmatpush1.bf16.msra.mxu0 %v566
    %729 = vmatprep.subr.bf16.mxu0 %v571
    %730 = vmatpush1.bf16.msra.mxu0 %v570
    %731 = vmatprep.subr.bf16.mxu0 %v575
    %732 = vmatpush1.bf16.msra.mxu0 %v574
    %733 = vmatprep.subr.bf16.mxu0 %v579
    %734 = vmatpush1.bf16.msra.mxu0 %v578
    %735 = vmatprep.subr.bf16.mxu0 0
    %736 = vmatpush1.bf16.msra.mxu0 0
    %737 = vmatprep.subr.bf16.mxu0 0
    %738 = vmatpush1.bf16.msra.mxu0 0
    %739 = vmatprep.subr.bf16.mxu0 0
    %740 = vmatpush1.bf16.msra.mxu0 0
    %741 = vmatprep.subr.bf16.mxu0 0
    %742 = vmatpush1.bf16.msra.mxu0 0
    %743 = vmatprep.subr.bf16.mxu0 0
    %744 = vmatpush1.bf16.msra.mxu0 0
    %745 = vmatprep.subr.bf16.mxu0 0
    %746 = vmatpush1.bf16.msra.mxu0 0
    %747 = vmatprep.subr.bf16.mxu0 0
    %748 = vmatpush1.bf16.msra.mxu0 0
    %749 = vmatprep.subr.bf16.mxu0 0
    %750 = vmatpush1.bf16.msra.mxu0 0
    %751 = vmatprep.mubr.bf16.mxu0 0
    %752 = vmatmul.mubr.bf16.gmra.mrb[0].mxu0 %v79
    %v753 = vpop.f32.mrb[0].mxu0
    %v754 = vadd.f32 %v713, %v753
    %v755 = vpop.f32.mrb[0].mxu0
    %v756 = vadd.f32 %v715, %v755
    %v757 = vpop.f32.mrb[0].mxu0
    %v758 = vpop.f32.mrb[0].mxu0
    %759 = vdwg.mxu0
    %760 = vmatprep.subr.bf16.mxu0 %v489
    %761 = vmatpush1.bf16.msra.mxu0 %v488
    %762 = vmatprep.subr.bf16.mxu0 %v493
    %763 = vmatpush1.bf16.msra.mxu0 %v492
    %764 = vmatprep.subr.bf16.mxu0 %v497
    %765 = vmatpush1.bf16.msra.mxu0 %v496
    %766 = vmatprep.subr.bf16.mxu0 %v501
    %767 = vmatpush1.bf16.msra.mxu0 %v500
    %768 = vmatprep.subr.bf16.mxu0 %v505
    %769 = vmatpush1.bf16.msra.mxu0 %v504
    %770 = vmatprep.subr.bf16.mxu0 %v509
    %771 = vmatpush1.bf16.msra.mxu0 %v508
    %772 = vmatprep.subr.bf16.mxu0 %v513
    %773 = vmatpush1.bf16.msra.mxu0 %v512
    %774 = vmatprep.subr.bf16.mxu0 %v517
    %775 = vmatpush1.bf16.msra.mxu0 %v516
    %776 = vmatprep.subr.bf16.mxu0 %v521
    %777 = vmatpush1.bf16.msra.mxu0 %v520
    %778 = vmatprep.subr.bf16.mxu0 %v525
    %779 = vmatpush1.bf16.msra.mxu0 %v524
    %780 = vmatprep.subr.bf16.mxu0 %v529
    %781 = vmatpush1.bf16.msra.mxu0 %v528
    %782 = vmatprep.subr.bf16.mxu0 %v533
    %783 = vmatpush1.bf16.msra.mxu0 %v532
    %784 = vmatprep.subr.bf16.mxu0 %v537
    %785 = vmatpush1.bf16.msra.mxu0 %v536
    %786 = vmatprep.subr.bf16.mxu0 %v541
    %787 = vmatpush1.bf16.msra.mxu0 %v540
    %788 = vmatprep.subr.bf16.mxu0 %v545
    %789 = vmatpush1.bf16.msra.mxu0 %v544
    %790 = vmatprep.subr.bf16.mxu0 %v549
    %791 = vmatpush1.bf16.msra.mxu0 %v548
    %792 = vmatprep.mubr.bf16.mxu0 %v78
    %793 = vmatmul.mubr.bf16.gmra.mrb[0].mxu0 %v77
    %v794 = vpop.f32.mrb[0].mxu0
    %v795 = vadd.f32 %v189, %v794
    %v796 = vpop.f32.mrb[0].mxu0
    %v797 = vadd.f32 %v193, %v796
    %v798 = vpop.f32.mrb[0].mxu0
    %v799 = vpop.f32.mrb[0].mxu0
    %800 = vdwg.mxu0
    %801 = vmatprep.subr.bf16.mxu0 %v553
    %802 = vmatpush1.bf16.msra.mxu0 %v552
    %803 = vmatprep.subr.bf16.mxu0 %v557
    %804 = vmatpush1.bf16.msra.mxu0 %v556
    %805 = vmatprep.subr.bf16.mxu0 %v561
    %806 = vmatpush1.bf16.msra.mxu0 %v560
    %807 = vmatprep.subr.bf16.mxu0 %v565
    %808 = vmatpush1.bf16.msra.mxu0 %v564
    %809 = vmatprep.subr.bf16.mxu0 %v569
    %810 = vmatpush1.bf16.msra.mxu0 %v568
    %811 = vmatprep.subr.bf16.mxu0 %v573
    %812 = vmatpush1.bf16.msra.mxu0 %v572
    %813 = vmatprep.subr.bf16.mxu0 %v577
    %814 = vmatpush1.bf16.msra.mxu0 %v576
    %815 = vmatprep.subr.bf16.mxu0 %v581
    %816 = vmatpush1.bf16.msra.mxu0 %v580
    %817 = vmatprep.subr.bf16.mxu0 0
    %818 = vmatpush1.bf16.msra.mxu0 0
    %819 = vmatprep.subr.bf16.mxu0 0
    %820 = vmatpush1.bf16.msra.mxu0 0
    %821 = vmatprep.subr.bf16.mxu0 0
    %822 = vmatpush1.bf16.msra.mxu0 0
    %823 = vmatprep.subr.bf16.mxu0 0
    %824 = vmatpush1.bf16.msra.mxu0 0
    %825 = vmatprep.subr.bf16.mxu0 0
    %826 = vmatpush1.bf16.msra.mxu0 0
    %827 = vmatprep.subr.bf16.mxu0 0
    %828 = vmatpush1.bf16.msra.mxu0 0
    %829 = vmatprep.subr.bf16.mxu0 0
    %830 = vmatpush1.bf16.msra.mxu0 0
    %831 = vmatprep.subr.bf16.mxu0 0
    %832 = vmatpush1.bf16.msra.mxu0 0
    %833 = vmatprep.mubr.bf16.mxu0 0
    %834 = vmatmul.mubr.bf16.gmra.mrb[0].mxu0 %v79
    %v835 = vpop.f32.mrb[0].mxu0
    %v836 = vadd.f32 %v795, %v835
    %v837 = vpop.f32.mrb[0].mxu0
    %v838 = vadd.f32 %v797, %v837
    %v839 = vpop.f32.mrb[0].mxu0
    %v840 = vpop.f32.mrb[0].mxu0
    %841 = vdwg.mxu0
    %v842 = vxor.u32 %v836, 2147483648
    %v843 = vmul.f32 %v842, 1.442695
    %v844 = vpow.pop %v843
    %v845 = vadd.f32 %v844, 1.0
    %v846 = vrcp.pop %v845
    %v847 = vmul.f32 1.0, %v846
    %v848 = vmul.f32 %v76, %v847
    %v849 = vpack.c.bf16 %v848, %v848
    %v850 = vld [vmem:[#allocation8] sm:$0xf]
    %v851 = vld [vmem:[#allocation8 + $0x4] sm:$0xf]
    %v852 = vld [vmem:[#allocation8 + $0x8] sm:$0xf]
    %v853 = vld [vmem:[#allocation8 + $0xc] sm:$0xf]
    %v854 = vld [vmem:[#allocation8 + $0x10] sm:$0xf]
    %v855 = vld [vmem:[#allocation8 + $0x14] sm:$0xf]
    %v856 = vld [vmem:[#allocation8 + $0x18] sm:$0xf]
    %v857 = vld [vmem:[#allocation8 + $0x1c] sm:$0xf]
    %v858 = vld [vmem:[#allocation8 + $0x20] sm:$0xf]
    %v859 = vld [vmem:[#allocation8 + $0x24] sm:$0xf]
    %v860 = vld [vmem:[#allocation8 + $0x28] sm:$0xf]
    %v861 = vld [vmem:[#allocation8 + $0x2c] sm:$0xf]
    %v862 = vld [vmem:[#allocation8 + $0x30] sm:$0xf]
    %v863 = vld [vmem:[#allocation8 + $0x34] sm:$0xf]
    %v864 = vld [vmem:[#allocation8 + $0x38] sm:$0xf]
    %v865 = vld [vmem:[#allocation8 + $0x3c] sm:$0xf]
    %v882 = vunpack.c.l.b16 %v850
    %v883 = vunpack.c.l.b16 %v851
    %v884 = vunpack.c.l.b16 %v852
    %v885 = vunpack.c.l.b16 %v853
    %v886 = vunpack.c.l.b16 %v854
    %v887 = vunpack.c.l.b16 %v855
    %v888 = vunpack.c.l.b16 %v856
    %v889 = vunpack.c.l.b16 %v857
    %v890 = vunpack.c.l.b16 %v858
    %v891 = vunpack.c.l.b16 %v859
    %v892 = vunpack.c.l.b16 %v860
    %v893 = vunpack.c.l.b16 %v861
    %v894 = vunpack.c.l.b16 %v862
    %v895 = vunpack.c.l.b16 %v863
    %v896 = vunpack.c.l.b16 %v864
    %v897 = vunpack.c.l.b16 %v865
    %v898 = vpack.c.b16 %v883, %v882
    %v899 = vpack.c.b16 %v885, %v884
    %v900 = vpack.c.b16 %v887, %v886
    %v901 = vpack.c.b16 %v889, %v888
    %v902 = vpack.c.b16 %v891, %v890
    %v903 = vpack.c.b16 %v893, %v892
    %v904 = vpack.c.b16 %v895, %v894
    %v905 = vpack.c.b16 %v897, %v896
    %914 = vmatprep.subr.bf16.mxu0 0
    %915 = vmatpush1.bf16.msra.mxu0 %v898
    %916 = vmatprep.subr.bf16.mxu0 0
    %917 = vmatpush1.bf16.msra.mxu0 %v899
    %918 = vmatprep.subr.bf16.mxu0 0
    %919 = vmatpush1.bf16.msra.mxu0 %v900
    %920 = vmatprep.subr.bf16.mxu0 0
    %921 = vmatpush1.bf16.msra.mxu0 %v901
    %922 = vmatprep.subr.bf16.mxu0 0
    %923 = vmatpush1.bf16.msra.mxu0 %v902
    %924 = vmatprep.subr.bf16.mxu0 0
    %925 = vmatpush1.bf16.msra.mxu0 %v903
    %926 = vmatprep.subr.bf16.mxu0 0
    %927 = vmatpush1.bf16.msra.mxu0 %v904
    %928 = vmatprep.subr.bf16.mxu0 0
    %929 = vmatpush1.bf16.msra.mxu0 %v905
    %930 = vmatprep.subr.bf16.mxu0 0
    %931 = vmatpush1.bf16.msra.mxu0 0
    %932 = vmatprep.subr.bf16.mxu0 0
    %933 = vmatpush1.bf16.msra.mxu0 0
    %934 = vmatprep.subr.bf16.mxu0 0
    %935 = vmatpush1.bf16.msra.mxu0 0
    %936 = vmatprep.subr.bf16.mxu0 0
    %937 = vmatpush1.bf16.msra.mxu0 0
    %938 = vmatprep.subr.bf16.mxu0 0
    %939 = vmatpush1.bf16.msra.mxu0 0
    %940 = vmatprep.subr.bf16.mxu0 0
    %941 = vmatpush1.bf16.msra.mxu0 0
    %942 = vmatprep.subr.bf16.mxu0 0
    %943 = vmatpush1.bf16.msra.mxu0 0
    %944 = vmatprep.subr.bf16.mxu0 0
    %945 = vmatpush1.bf16.msra.mxu0 0
    %946 = vmatprep.mubr.bf16.mxu0 0
    %947 = vmatmul.mubr.bf16.gmra.mrb[0].mxu0 %v849
    %v948 = vpop.f32.mrb[0].mxu0
    %v949 = vadd.f32 0.0, %v948
    %v950 = vpop.f32.mrb[0].mxu0
    %v951 = vpop.f32.mrb[0].mxu0
    %v952 = vpop.f32.mrb[0].mxu0
    %953 = vdwg.mxu0
    %v954 = vxor.u32 %v754, 2147483648
    %v955 = vmul.f32 %v954, 1.442695
    %v956 = vpow.pop %v955
    %v957 = vadd.f32 %v956, 1.0
    %v958 = vrcp.pop %v957
    %v959 = vmul.f32 1.0, %v958
    %v960 = vxor.u32 %v756, 2147483648
    %v961 = vmul.f32 %v960, 1.442695
    %v962 = vpow.pop %v961
    %v963 = vadd.f32 %v962, 1.0
    %v964 = vrcp.pop %v963
    %v965 = vmul.f32 1.0, %v964
    %v966 = vadd.f32 %v838, %v949
    %v967 = vtanh.pop %v966
    %v968 = vsub.f32 1.0, %v965
    %v969 = vmul.f32 %v968, %v967
    %v970 = vmul.f32 %v959, %v76
    %v971 = vadd.f32 %v969, %v970
    %972 = vst [vmem:[#allocation10] sm:$0xff] %v971
    // Predicated region
    $region42: #{tpu_custom_call.1} parent=1 // pred_check
      _
    $region43: #{tpu_custom_call.1} parent=1 // pred_check_branch
      %974 = sbr.rel (0) target = $region45
    $region44: #{tpu_custom_call.1} parent=1 // pred_region
      %s976 = ssub.s32 128, 128
      %977 = vsyncadd [#allocation4], %s976
      %s979 = sshll.u32 [#allocation10], 4
      %s980 = int_to_ptr.vmem [resolvable:$true] %s979
      %982 = dma.vmem_to_hbm [thread:$0]  %s980, 128, %s6, [#allocation4]
    $region45: #{tpu_custom_call.1} parent=1 // pred_fallthru
      _
    // Predicated region
    $region46: #{tpu_custom_call.1} parent=1 // pred_check
      _
    $region47: #{tpu_custom_call.1} parent=1 // pred_check_branch
      %984 = sbr.rel (0) target = $region49
    $region48: #{tpu_custom_call.1} parent=1 // pred_region
      %985 = dma.done [#allocation4], 128
    $region49: #{tpu_custom_call.1} parent=1 // pred_fallthru
      _
    %986 = vsyncpa [#allocation3], 1
    %987 = vsyncpa [#allocation6], 1
    %988 = vsyncpa [#allocation9], 1
    %989 = vsyncpa [#allocation4], 1

</llo_original>
